<compile_context>
chip_gen: v7x
topology: tpu7x:2x2x1
jax: 0.10.0
libtpu: 0.0.40
codegen_flags: <defaults>
</compile_context>

<pallas_src>
import functools

import jax
import jax.numpy as jnp
from jax.experimental import pallas as pl
from jax.experimental.pallas import tpu as pltpu

TIMESTEPS = 8
PRECISION = 1e-4
POWER = 2

_LANE = 128
_BLOCK_ROWS = 2048        # rows per grid step on the large path (1 MiB f32 blocks)
_NOGRID_MAX_ROWS = 4096   # single no-grid call up to 4096*128 elems (2 MiB in VMEM)


# ----------------------------------------------------------------------------
# Schedule construction (one-time, plain JAX "glue" mirroring torch __init__).
# ----------------------------------------------------------------------------
def clip_noise_schedule(alphas2: jnp.ndarray, clip_value: float = 0.001) -> jnp.ndarray:
    alphas2 = jnp.concatenate([jnp.ones((1,), dtype=alphas2.dtype), alphas2], axis=0)
    alphas_step = jnp.clip(alphas2[1:] / alphas2[:-1], clip_value, 1.0)
    return jnp.cumprod(alphas_step, axis=0)


def polynomial_schedule(timesteps: int, s: float = 1e-4, power: int = 2) -> jnp.ndarray:
    steps = timesteps + 1
    x = jnp.linspace(0.0, float(steps), steps)
    alphas2 = (1.0 - jnp.power(x / steps, power)) ** 2
    alphas2 = clip_noise_schedule(alphas2, clip_value=0.001)
    precision = 1.0 - 2.0 * s
    return precision * alphas2 + s


def init_noise_schedule(timesteps: int, precision: float, power: int = 2) -> jnp.ndarray:
    """One-time init (equivalent of torch __init__). Returns flat (timesteps+1,) f32 gamma."""
    alphas2 = polynomial_schedule(timesteps, s=precision, power=power)
    sigmas2 = 1.0 - alphas2
    log_alphas2_to_sigmas2 = jnp.log(alphas2) - jnp.log(sigmas2)
    return (-log_alphas2_to_sigmas2).astype(jnp.float32)


# ----------------------------------------------------------------------------
# Pallas kernel: t -> gamma[clip(round(t * timesteps), 0, timesteps)]
# ----------------------------------------------------------------------------
def _gamma_lookup_kernel(t_ref, gamma_ref, out_ref, *, timesteps: int):
    # t_ref:     (R, 128)        f32 VMEM block of normalized times
    # gamma_ref: (timesteps+1,)  f32 SMEM scalar lookup table
    # out_ref:   (R, 128)        f32 VMEM block
    t = t_ref[...]
    # Clamp in float before the int cast so slightly-out-of-range values and
    # ragged-tail garbage stay in-bounds. (NaN inputs remain impl-defined.)
    idx = jnp.round(
        jnp.clip(t * float(timesteps), 0.0, float(timesteps))).astype(jnp.int32)
    # Unrolled compare/select chain over SMEM scalars (timesteps is tiny/static).
    acc = jnp.broadcast_to(gamma_ref[0], t.shape)
    for k in range(1, timesteps + 1):
        acc = jnp.where(idx == k, gamma_ref[k], acc)
    out_ref[...] = acc.astype(out_ref.dtype)


def predefined_noise_schedule_forward(t: jnp.ndarray,
                                      gamma: jnp.ndarray,
                                      timesteps: int,
                                      *,
                                      block_rows: int = _BLOCK_ROWS,
                                      nogrid_max_rows: int = _NOGRID_MAX_ROWS) -> jnp.ndarray:
    """Pallas equivalent of PredefinedNoiseSchedule.forward.

    t:     any-shape float array of normalized times (typically (B, 1)).
    gamma: flat (timesteps + 1,) f32 table from init_noise_schedule.
    """
    assert gamma.shape == (timesteps + 1,)
    orig_shape = t.shape
    n = t.size
    t_flat = jnp.reshape(t, (-1,)).astype(jnp.float32)
    gamma = jnp.asarray(gamma, dtype=jnp.float32)

    # Lane-dense 2D layout: pad only to the next multiple of 128 elements.
    n_pad = max(_LANE, ((n + _LANE - 1) // _LANE) * _LANE)
    if n_pad != n:
        t_flat = jnp.pad(t_flat, (0, n_pad - n))
    rows = n_pad // _LANE
    t2d = t_flat.reshape(rows, _LANE)

    kernel = functools.partial(_gamma_lookup_kernel, timesteps=timesteps)

    if rows <= nogrid_max_rows:
        # Small/medium batch: single no-grid call, whole arrays resident in VMEM.
        out = pl.pallas_call(
            kernel,
            out_shape=jax.ShapeDtypeStruct((rows, _LANE), jnp.float32),
            in_specs=[
                pl.BlockSpec(memory_space=pltpu.MemorySpace.VMEM),
                pl.BlockSpec(memory_space=pltpu.MemorySpace.SMEM),
            ],
            out_specs=pl.BlockSpec(memory_space=pltpu.MemorySpace.VMEM),
        )(t2d, gamma)
    else:
        # Large batch: ~1 MiB blocks, ragged last block handled by Pallas
        # (writes masked; clamped index makes garbage tail lanes harmless).
        out = pl.pallas_call(
            kernel,
            out_shape=jax.ShapeDtypeStruct((rows, _LANE), jnp.float32),
            grid=(pl.cdiv(rows, block_rows),),
            in_specs=[
                pl.BlockSpec((block_rows, _LANE), lambda i: (i, 0)),
                pl.BlockSpec(memory_space=pltpu.MemorySpace.SMEM),
            ],
            out_specs=pl.BlockSpec((block_rows, _LANE), lambda i: (i, 0)),
            compiler_params=pltpu.CompilerParams(
                dimension_semantics=("parallel",)),
        )(t2d, gamma)

    out_flat = out.reshape(-1)
    if n_pad != n:
        out_flat = out_flat[:n]
    return out_flat.reshape(orig_shape)


if __name__ == "__main__":
    key = jax.random.PRNGKey(0)
    k1, k2 = jax.random.split(key)

    # Deterministic "parameter" init: flat gamma table built once.
    gamma_table = init_noise_schedule(TIMESTEPS, PRECISION, POWER)

    # --- Case 1: typical tiny batch, shape (8, 1), incl. exact endpoints. ---
    batch = 8
    t_rand = jax.random.uniform(k1, (batch - 2, 1), dtype=jnp.float32)
    t = jnp.concatenate(
        [t_rand, jnp.array([[0.0], [1.0]], dtype=jnp.float32)], axis=0)
    out = jax.block_until_ready(
        predefined_noise_schedule_forward(t, gamma_table, TIMESTEPS))

    t_int = jnp.clip(jnp.round(t * TIMESTEPS).astype(jnp.int32), 0, TIMESTEPS)
    ref = jnp.take(gamma_table, t_int[:, 0]).reshape(batch, 1)
    assert out.shape == (batch, 1)
    assert out.dtype == jnp.float32
    assert jnp.allclose(out, ref, atol=1e-6), (out, ref)

    # --- Case 2: exercise the gridded / ragged-last-block path at small size
    # by lowering the tiling knobs (3000 elems -> 24 rows -> 2 x 16-row blocks).
    n2 = 3000
    t2 = jax.random.uniform(k2, (n2,), dtype=jnp.float32)
    out2 = jax.block_until_ready(
        predefined_noise_schedule_forward(t2, gamma_table, TIMESTEPS,
                                          block_rows=16, nogrid_max_rows=8))
    t2_int = jnp.clip(jnp.round(t2 * TIMESTEPS).astype(jnp.int32), 0, TIMESTEPS)
    ref2 = jnp.take(gamma_table, t2_int)
    assert out2.shape == (n2,)
    assert jnp.allclose(out2, ref2, atol=1e-6)

    print("KERNEL_OK")
</pallas_src>

<mosaic_0001>
module attributes {stable_mosaic.version = 11 : i64} {
  func.func @_gamma_lookup_kernel(%arg0: memref<1x128xf32, #tpu.memory_space<vmem>>, %arg1: memref<9xf32, #tpu.memory_space<smem>>, %arg2: memref<1x128xf32, #tpu.memory_space<vmem>>) attributes {dimension_semantics = [], scalar_prefetch = 0 : i64, scratch_operands = 0 : i64, tpu.core_type = #tpu.core_type<tc>} {
    %c0 = arith.constant 0 : index
    %c0_0 = arith.constant 0 : index
    %0 = vector.load %arg0[%c0, %c0_0] : memref<1x128xf32, #tpu.memory_space<vmem>>, vector<1x128xf32>
    %cst = arith.constant 8.000000e+00 : f32
    %1 = vector.broadcast %cst : f32 to vector<1x128xf32>
    %2 = arith.mulf %0, %1 : vector<1x128xf32>
    %cst_1 = arith.constant 0.000000e+00 : f32
    %cst_2 = arith.constant 8.000000e+00 : f32
    %3 = vector.broadcast %cst_1 : f32 to vector<1x128xf32>
    %4 = arith.maximumf %3, %2 : vector<1x128xf32>
    %5 = vector.broadcast %cst_2 : f32 to vector<1x128xf32>
    %6 = arith.minimumf %5, %4 : vector<1x128xf32>
    %7 = math.roundeven %6 : vector<1x128xf32>
    %8 = arith.fptosi %7 : vector<1x128xf32> to vector<1x128xi32>
    %c0_3 = arith.constant 0 : index
    %9 = memref.load %arg1[%c0_3] : memref<9xf32, #tpu.memory_space<smem>>
    %10 = vector.broadcast %9 : f32 to vector<1x128xf32>
    %c1_i32 = arith.constant 1 : i32
    %11 = vector.broadcast %c1_i32 : i32 to vector<1x128xi32>
    %12 = arith.cmpi eq, %8, %11 : vector<1x128xi32>
    %c1 = arith.constant 1 : index
    %13 = memref.load %arg1[%c1] : memref<9xf32, #tpu.memory_space<smem>>
    %14 = vector.broadcast %13 : f32 to vector<1x128xf32>
    %15 = arith.select %12, %14, %10 : vector<1x128xi1>, vector<1x128xf32>
    %c2_i32 = arith.constant 2 : i32
    %16 = vector.broadcast %c2_i32 : i32 to vector<1x128xi32>
    %17 = arith.cmpi eq, %8, %16 : vector<1x128xi32>
    %c2 = arith.constant 2 : index
    %18 = memref.load %arg1[%c2] : memref<9xf32, #tpu.memory_space<smem>>
    %19 = vector.broadcast %18 : f32 to vector<1x128xf32>
    %20 = arith.select %17, %19, %15 : vector<1x128xi1>, vector<1x128xf32>
    %c3_i32 = arith.constant 3 : i32
    %21 = vector.broadcast %c3_i32 : i32 to vector<1x128xi32>
    %22 = arith.cmpi eq, %8, %21 : vector<1x128xi32>
    %c3 = arith.constant 3 : index
    %23 = memref.load %arg1[%c3] : memref<9xf32, #tpu.memory_space<smem>>
    %24 = vector.broadcast %23 : f32 to vector<1x128xf32>
    %25 = arith.select %22, %24, %20 : vector<1x128xi1>, vector<1x128xf32>
    %c4_i32 = arith.constant 4 : i32
    %26 = vector.broadcast %c4_i32 : i32 to vector<1x128xi32>
    %27 = arith.cmpi eq, %8, %26 : vector<1x128xi32>
    %c4 = arith.constant 4 : index
    %28 = memref.load %arg1[%c4] : memref<9xf32, #tpu.memory_space<smem>>
    %29 = vector.broadcast %28 : f32 to vector<1x128xf32>
    %30 = arith.select %27, %29, %25 : vector<1x128xi1>, vector<1x128xf32>
    %c5_i32 = arith.constant 5 : i32
    %31 = vector.broadcast %c5_i32 : i32 to vector<1x128xi32>
    %32 = arith.cmpi eq, %8, %31 : vector<1x128xi32>
    %c5 = arith.constant 5 : index
    %33 = memref.load %arg1[%c5] : memref<9xf32, #tpu.memory_space<smem>>
    %34 = vector.broadcast %33 : f32 to vector<1x128xf32>
    %35 = arith.select %32, %34, %30 : vector<1x128xi1>, vector<1x128xf32>
    %c6_i32 = arith.constant 6 : i32
    %36 = vector.broadcast %c6_i32 : i32 to vector<1x128xi32>
    %37 = arith.cmpi eq, %8, %36 : vector<1x128xi32>
    %c6 = arith.constant 6 : index
    %38 = memref.load %arg1[%c6] : memref<9xf32, #tpu.memory_space<smem>>
    %39 = vector.broadcast %38 : f32 to vector<1x128xf32>
    %40 = arith.select %37, %39, %35 : vector<1x128xi1>, vector<1x128xf32>
    %c7_i32 = arith.constant 7 : i32
    %41 = vector.broadcast %c7_i32 : i32 to vector<1x128xi32>
    %42 = arith.cmpi eq, %8, %41 : vector<1x128xi32>
    %c7 = arith.constant 7 : index
    %43 = memref.load %arg1[%c7] : memref<9xf32, #tpu.memory_space<smem>>
    %44 = vector.broadcast %43 : f32 to vector<1x128xf32>
    %45 = arith.select %42, %44, %40 : vector<1x128xi1>, vector<1x128xf32>
    %c8_i32 = arith.constant 8 : i32
    %46 = vector.broadcast %c8_i32 : i32 to vector<1x128xi32>
    %47 = arith.cmpi eq, %8, %46 : vector<1x128xi32>
    %c8 = arith.constant 8 : index
    %48 = memref.load %arg1[%c8] : memref<9xf32, #tpu.memory_space<smem>>
    %49 = vector.broadcast %48 : f32 to vector<1x128xf32>
    %50 = arith.select %47, %49, %45 : vector<1x128xi1>, vector<1x128xf32>
    %c0_4 = arith.constant 0 : index
    %c0_5 = arith.constant 0 : index
    %51 = vector.load %arg2[%c0_4, %c0_5] : memref<1x128xf32, #tpu.memory_space<vmem>>, vector<1x128xf32>
    tpu.vector_store %arg2[%c0_4, %c0_5], %50 {strides = array<i32>} : memref<1x128xf32, #tpu.memory_space<vmem>>, vector<1x128xf32>,
    return
  }
}

</mosaic_0001>

<llo_original>
// kernel: tpu_custom_call.1
$region0: #{tpu_custom_call.1}
  #allocation0 [shape = 'u32[]', space=smem, size = 0x4, offset = 0x4, fixed_abs, tag = 'smem constant byte address 0x4 - core index']
  #allocation1 [shape = 'u32[144,128]{1,0:T(1,128)}', space=vmem, size = 0x12000, scoped, tag = 'internal scratch']
  %s0 = inlined_call_operand.hbm [shape: f32[1,128], index: 0, kind: input, shape index: {}]
  %s1 = inlined_call_operand.vmem [shape: f32[9], index: 1, kind: input, shape index: {}]
  %s2 = inlined_call_operand.hbm [shape: f32[1,128], index: 2, kind: output, shape index: {}]
  %s3 = sld [smem:[#allocation0]]
  $region26: #{tpu_custom_call.1} parent=0
    _
  %s5 = ssub.s32 1, %s3
  %s6 = scalar_select 0, %s5, %s3
  $region1: #{tpu_custom_call.1} parent=0
    #allocation2 [shape = 'u8[512]{0}', space=vmem, size = 0x400, scoped, tag = 'input window, operand 0, single buffered']
    #allocation3 [shape = 's32[1]{0}', space=sflag, size = 0x4, scoped, tag = 'scoped memory for tpu_custom_call.1']
    #allocation4 [shape = 's32[1]{0}', space=sflag, size = 0x4, scoped, tag = 'scoped memory for tpu_custom_call.1']
    #allocation5 [shape = 's32[1]{0}', space=sflag, size = 0x4, scoped, tag = 'scoped memory for tpu_custom_call.1']
    #allocation6 [shape = 'u8[512]{0}', space=smem, size = 0x200, scoped, tag = 'input window, operand 1, single buffered']
    #allocation7 [shape = 'u8[512]{0}', space=vmem, size = 0x400, scoped, tag = 'output window, operand 0, single buffered']
    %7 = vsyncpa [#allocation3], 0
    %8 = vsyncpa [#allocation5], 0
    %9 = vsyncpa [#allocation4], 0
    // Predicated region
    $region2: #{tpu_custom_call.1} parent=1 // pred_check
      _
    $region3: #{tpu_custom_call.1} parent=1 // pred_check_branch
      %11 = sbr.rel (0) target = $region5
    $region4: #{tpu_custom_call.1} parent=1 // pred_region
      %s13 = ssub.s32 16, 16
      %14 = vsyncadd [#allocation3], %s13
      %s16 = sshll.u32 [#allocation2], 4
      %s17 = int_to_ptr.vmem [resolvable:$true] %s16
      %19 = dma.hbm_to_vmem [thread:$0]  %s0, 16, %s17, [#allocation3]
    $region5: #{tpu_custom_call.1} parent=1 // pred_fallthru
      _
    // Predicated region
    $region6: #{tpu_custom_call.1} parent=1 // pred_check
      _
    $region7: #{tpu_custom_call.1} parent=1 // pred_check_branch
      %21 = sbr.rel (0) target = $region9
    $region8: #{tpu_custom_call.1} parent=1 // pred_region
      %s23 = ssub.s32 16, 16
      %24 = vsyncadd [#allocation5], %s23
      %s26 = sshll.u32 %s1, 4
      %s27 = int_to_ptr.vmem [resolvable:$true] %s26
      %29 = dma.vmem_to_smem %s27, 16, [#allocation6], [#allocation5]
    $region9: #{tpu_custom_call.1} parent=1 // pred_fallthru
      _
    // Predicated region
    $region10: #{tpu_custom_call.1} parent=1 // pred_check
      _
    $region11: #{tpu_custom_call.1} parent=1 // pred_check_branch
      %31 = sbr.rel (0) target = $region13
    $region12: #{tpu_custom_call.1} parent=1 // pred_region
      %32 = dma.done [#allocation3], 16
    $region13: #{tpu_custom_call.1} parent=1 // pred_fallthru
      _
    // Predicated region
    $region14: #{tpu_custom_call.1} parent=1 // pred_check
      _
    $region15: #{tpu_custom_call.1} parent=1 // pred_check_branch
      %34 = sbr.rel (0) target = $region17
    $region16: #{tpu_custom_call.1} parent=1 // pred_region
      %35 = dma.done [#allocation5], 16
    $region17: #{tpu_custom_call.1} parent=1 // pred_fallthru
      _
    %36 = sfence
    %v37 = vld [vmem:[#allocation2] sm:$0x1]
    %v38 = vmul.f32 %v37, 8.0
    %v39 = vmax.f32 %v38, 0.0
    %v40 = vmin.f32 %v39, 8.0
    %v41 = vcvt.f32.s32.ties.to.even %v40
    %s42 = sld [smem:[#allocation6]]
    %v43 = vstv %s42
    %vm44 = vcmp.eq.s32.totalorder %v41, 1
    %s45 = sld [smem:[#allocation6 + $0x1]]
    %v46 = vstv %s45
    %v47 = vsel %vm44, %v46, %v43
    %vm48 = vcmp.eq.s32.totalorder %v41, 2
    %s49 = sld [smem:[#allocation6 + $0x2]]
    %v50 = vstv %s49
    %v51 = vsel %vm48, %v50, %v47
    %vm52 = vcmp.eq.s32.totalorder %v41, 3
    %s53 = sld [smem:[#allocation6 + $0x3]]
    %v54 = vstv %s53
    %v55 = vsel %vm52, %v54, %v51
    %vm56 = vcmp.eq.s32.totalorder %v41, 4
    %s57 = sld [smem:[#allocation6 + $0x4]]
    %v58 = vstv %s57
    %v59 = vsel %vm56, %v58, %v55
    %vm60 = vcmp.eq.s32.totalorder %v41, 5
    %s61 = sld [smem:[#allocation6 + $0x5]]
    %v62 = vstv %s61
    %v63 = vsel %vm60, %v62, %v59
    %vm64 = vcmp.eq.s32.totalorder %v41, 6
    %s65 = sld [smem:[#allocation6 + $0x6]]
    %v66 = vstv %s65
    %v67 = vsel %vm64, %v66, %v63
    %vm68 = vcmp.eq.s32.totalorder %v41, 7
    %s69 = sld [smem:[#allocation6 + $0x7]]
    %v70 = vstv %s69
    %v71 = vsel %vm68, %v70, %v67
    %vm72 = vcmp.eq.s32.totalorder %v41, 8
    %s73 = sld [smem:[#allocation6 + $0x8]]
    %v74 = vstv %s73
    %v75 = vsel %vm72, %v74, %v71
    %76 = vst [vmem:[#allocation7] sm:$0x1] %v75
    // Predicated region
    $region18: #{tpu_custom_call.1} parent=1 // pred_check
      _
    $region19: #{tpu_custom_call.1} parent=1 // pred_check_branch
      %78 = sbr.rel (0) target = $region21
    $region20: #{tpu_custom_call.1} parent=1 // pred_region
      %s80 = ssub.s32 16, 16
      %81 = vsyncadd [#allocation4], %s80
      %s83 = sshll.u32 [#allocation7], 4
      %s84 = int_to_ptr.vmem [resolvable:$true] %s83
      %86 = dma.vmem_to_hbm [thread:$0]  %s84, 16, %s2, [#allocation4]
    $region21: #{tpu_custom_call.1} parent=1 // pred_fallthru
      _
    // Predicated region
    $region22: #{tpu_custom_call.1} parent=1 // pred_check
      _
    $region23: #{tpu_custom_call.1} parent=1 // pred_check_branch
      %88 = sbr.rel (0) target = $region25
    $region24: #{tpu_custom_call.1} parent=1 // pred_region
      %89 = dma.done [#allocation4], 16
    $region25: #{tpu_custom_call.1} parent=1 // pred_fallthru
      _
    %90 = vsyncpa [#allocation3], 1
    %91 = vsyncpa [#allocation4], 1
    %92 = vsyncpa [#allocation5], 1

</llo_original>
